<compile_context>
chip_gen: v6e
topology: v6e:2x2x1
jax: 0.10.0
libtpu: 0.0.40
codegen_flags: <defaults>
</compile_context>

<pallas_src>
import jax
import jax.numpy as jnp
from jax.experimental import pallas as pl
from jax.experimental.pallas import tpu as pltpu


def _round_up(n: int, m: int) -> int:
    return ((n + m - 1) // m) * m


def mlp_kernel(x_ref, w1_ref, b1_ref, w2_ref, b2_ref, o_ref):
    xv = x_ref[...]
    if xv.dtype != w1_ref.dtype:
        # Cast on the VPU in-kernel (f32 -> bf16): cheaper than a wrapper-side pre-cast pass,
        # since this kernel is HBM-bound and the VPU has plenty of slack.
        xv = xv.astype(w1_ref.dtype)
    # fc1 on the MXU, f32 accumulation.
    h = jnp.dot(xv, w1_ref[...], preferred_element_type=jnp.float32)
    # Bias + LeakyReLU (negative_slope=0.01, matches torch.nn.LeakyReLU()) in f32.
    h = h + b1_ref[...]
    h = jnp.where(h > 0, h, 0.01 * h)
    # fc2: cast the hidden activation down only if the weights are reduced precision.
    if w2_ref.dtype != jnp.float32:
        h = h.astype(w2_ref.dtype)
    y = jnp.dot(h, w2_ref[...], preferred_element_type=jnp.float32)
    y = y + b2_ref[...]
    # Store transposed: classes (padded 14->16) on the sublane axis, batch on lanes.
    # The (tb, 16) -> (16, tb) transpose runs on the XLU, which is idle in this kernel.
    o_ref[...] = y.T.astype(o_ref.dtype)
    # TODO(synk): get_loss (nn.BCEWithLogitsLoss) not implemented; forward() only.


def prepare_mlp_params(w1, b1, w2, b2, *, compute_dtype=jnp.bfloat16):
    """Pad + cast parameters ONCE (cache the result; do not rebuild per forward call).

    w1: (in_dim, hidden)   b1: (1, hidden) or (hidden,)
    w2: (hidden, C)        b2: (1, C) or (C,)
    Weights are stored transposed vs. PyTorch (i.e. (in, out)).
    """
    compute_dtype = jnp.dtype(compute_dtype)
    in_dim, hidden = w1.shape
    num_classes = w2.shape[1]
    in_pad = _round_up(in_dim, 128)
    hid_pad = _round_up(hidden, 128)
    c_sub = _round_up(num_classes, 8)  # classes live on the sublane axis of the output

    w1p = jnp.zeros((in_pad, hid_pad), compute_dtype).at[:in_dim, :hidden].set(
        w1.astype(compute_dtype))
    b1p = jnp.zeros((1, hid_pad), jnp.float32).at[:, :hidden].set(
        jnp.reshape(b1, (1, -1)).astype(jnp.float32))
    w2p = jnp.zeros((hid_pad, c_sub), compute_dtype).at[:hidden, :num_classes].set(
        w2.astype(compute_dtype))
    b2p = jnp.zeros((1, c_sub), jnp.float32).at[:, :num_classes].set(
        jnp.reshape(b2, (1, -1)).astype(jnp.float32))

    return dict(w1p=w1p, b1p=b1p, w2p=w2p, b2p=b2p,
                in_dim=in_dim, hidden=hidden, num_classes=num_classes,
                in_pad=in_pad, hid_pad=hid_pad, c_sub=c_sub,
                compute_dtype=compute_dtype)


def mlp_classifier_forward(x, params, *, batch_tile=1024, out_dtype=None):
    """Forward pass of MLPClassifier using pre-prepared (padded/cast) params."""
    B, in_dim = x.shape
    assert in_dim == params["in_dim"], "input feature dim mismatch"
    in_pad, hid_pad, c_sub = params["in_pad"], params["hid_pad"], params["c_sub"]
    num_classes = params["num_classes"]
    compute_dtype = params["compute_dtype"]
    out_dtype = jnp.dtype(x.dtype if out_dtype is None else out_dtype)

    # Native sublane pack of the narrowest dtype involved (8 for f32, 16 for bf16, 32 for 8-bit).
    min_itemsize = min(jnp.dtype(x.dtype).itemsize, compute_dtype.itemsize, out_dtype.itemsize)
    pack = max(8, 32 // min_itemsize)
    batch_tile = max(128, _round_up(batch_tile, 128))

    # Batch tile selection: big tiles (amortize ~0.35us/step overhead), but keep >= 2 grid
    # steps when there is enough work so v7x's two TensorCores both participate.
    b_min = _round_up(B, pack)
    if b_min < 256:
        tb = b_min                                        # single step; block == full batch
    else:
        n_steps = max(2, pl.cdiv(b_min, batch_tile))
        tb = min(batch_tile, _round_up(pl.cdiv(b_min, n_steps), 128))
    b_pad = _round_up(b_min, tb)
    grid = (b_pad // tb,)

    # Avoid materializing a padded/cast copy of x when possible (in_dim=768 is lane-aligned).
    if (B, in_dim) != (b_pad, in_pad):
        xp = jnp.zeros((b_pad, in_pad), x.dtype).at[:B, :in_dim].set(x)
    else:
        xp = x

    x_item = jnp.dtype(x.dtype).itemsize
    w_item = compute_dtype.itemsize
    o_item = out_dtype.itemsize
    cost = pl.CostEstimate(
        flops=2 * b_pad * (in_pad * hid_pad + hid_pad * c_sub),
        transcendentals=0,
        bytes_accessed=(
            b_pad * in_pad * x_item                # x (streamed)
            + in_pad * hid_pad * w_item            # w1 (loaded once, VMEM-resident)
            + hid_pad * c_sub * w_item             # w2
            + (hid_pad + c_sub) * 4                # biases
            + c_sub * b_pad * o_item               # transposed output (16 x B), ~8x smaller
        ),
    )

    out_t = pl.pallas_call(
        mlp_kernel,
        out_shape=jax.ShapeDtypeStruct((c_sub, b_pad), out_dtype),
        grid_spec=pltpu.PrefetchScalarGridSpec(
            num_scalar_prefetch=0,
            grid=grid,
            in_specs=[
                pl.BlockSpec((tb, in_pad), lambda i: (i, 0)),        # x tile moves with grid
                pl.BlockSpec((in_pad, hid_pad), lambda i: (0, 0)),   # weights stay resident
                pl.BlockSpec((1, hid_pad), lambda i: (0, 0)),
                pl.BlockSpec((hid_pad, c_sub), lambda i: (0, 0)),
                pl.BlockSpec((1, c_sub), lambda i: (0, 0)),
            ],
            out_specs=pl.BlockSpec((c_sub, tb), lambda i: (0, i)),
        ),
        compiler_params=pltpu.CompilerParams(
            dimension_semantics=("parallel",),   # batch tiles independent (v7x: 2 TCs)
        ),
        cost_estimate=cost,
    )(xp, params["w1p"], params["b1p"], params["w2p"], params["b2p"])

    # Slice off class/batch padding and un-transpose (tiny: 16 x B).
    return out_t[:num_classes, :B].T


if __name__ == "__main__":
    in_dim, hidden, num_classes = 768, 256, 14

    key = jax.random.PRNGKey(0)
    kx, k1, kb1, k2, kb2 = jax.random.split(key, 5)

    # Deterministic synthetic parameters (PyTorch Linear default-ish scale).
    lim1 = 1.0 / (in_dim ** 0.5)
    lim2 = 1.0 / (hidden ** 0.5)
    w1 = jax.random.uniform(k1, (in_dim, hidden), minval=-lim1, maxval=lim1, dtype=jnp.float32)
    b1 = jax.random.uniform(kb1, (1, hidden), minval=-lim1, maxval=lim1, dtype=jnp.float32)
    w2 = jax.random.uniform(k2, (hidden, num_classes), minval=-lim2, maxval=lim2,
                            dtype=jnp.float32)
    b2 = jax.random.uniform(kb2, (1, num_classes), minval=-lim2, maxval=lim2, dtype=jnp.float32)

    def reference(x):
        h = x @ w1 + b1
        h = jnp.where(h > 0, h, 0.01 * h)
        return h @ w2 + b2

    # Parameters are padded/cast ONCE here (cached), not rebuilt per forward call.
    params_f32 = prepare_mlp_params(w1, b1, w2, b2, compute_dtype=jnp.float32)
    params_bf16 = prepare_mlp_params(w1, b1, w2, b2, compute_dtype=jnp.bfloat16)  # default path

    # Case 1: small batch, f32 compute path (tight tolerance).
    batch = 8
    x = jax.random.normal(kx, (batch, in_dim), dtype=jnp.float32)
    out_f32 = jax.block_until_ready(mlp_classifier_forward(x, params_f32))
    assert out_f32.shape == (batch, num_classes)
    assert jnp.allclose(out_f32, reference(x), atol=1e-4, rtol=1e-4)

    # Case 2: ragged batch, bf16 MXU path (f32 accumulation, in-kernel f32->bf16 cast of x).
    batch2 = 37
    x2 = jax.random.normal(kx, (batch2, in_dim), dtype=jnp.float32)
    out_bf16 = jax.block_until_ready(mlp_classifier_forward(x2, params_bf16))
    assert out_bf16.shape == (batch2, num_classes)
    assert jnp.allclose(out_bf16, reference(x2), atol=5e-2, rtol=5e-2)

    print("KERNEL_OK")
</pallas_src>

<mosaic_0001>
module attributes {stable_mosaic.version = 11 : i64} {
  func.func @mlp_kernel(%arg0: i32, %arg1: memref<8x768xf32, #tpu.memory_space<vmem>>, %arg2: memref<768x256xf32, #tpu.memory_space<vmem>>, %arg3: memref<1x256xf32, #tpu.memory_space<vmem>>, %arg4: memref<256x16xf32, #tpu.memory_space<vmem>>, %arg5: memref<1x16xf32, #tpu.memory_space<vmem>>, %arg6: memref<16x8xf32, #tpu.memory_space<vmem>>) attributes {dimension_semantics = [#tpu.dimension_semantics<parallel>], iteration_bounds = array<i64: 1>, scalar_prefetch = 0 : i64, scratch_operands = 0 : i64, tpu.core_type = #tpu.core_type<tc>, window_params = [{transform_indices = @transform_0, window_bounds = array<i64: 8, 768>}, {pipeline_mode = #tpu.pipeline_mode<synchronous>, transform_indices = @transform_1, window_bounds = array<i64: 768, 256>}, {pipeline_mode = #tpu.pipeline_mode<synchronous>, transform_indices = @transform_2, window_bounds = array<i64: 1, 256>}, {pipeline_mode = #tpu.pipeline_mode<synchronous>, transform_indices = @transform_3, window_bounds = array<i64: 256, 16>}, {pipeline_mode = #tpu.pipeline_mode<synchronous>, transform_indices = @transform_4, window_bounds = array<i64: 1, 16>}, {transform_indices = @transform_5, window_bounds = array<i64: 16, 8>}]} {
    %c0 = arith.constant 0 : index
    %c0_0 = arith.constant 0 : index
    %0 = vector.load %arg1[%c0, %c0_0] : memref<8x768xf32, #tpu.memory_space<vmem>>, vector<8x768xf32>
    %c0_1 = arith.constant 0 : index
    %c0_2 = arith.constant 0 : index
    %1 = vector.load %arg2[%c0_1, %c0_2] : memref<768x256xf32, #tpu.memory_space<vmem>>, vector<768x256xf32>
    %cst = arith.constant dense<0.000000e+00> : vector<8x256xf32>
    %2 = tpu.matmul %0, %1, %cst {dimension_numbers = #tpu.dot_dimension_numbers<[1], [0], [0], [1], [0, 0, 1, 1], [], []>} : vector<8x768xf32>, vector<768x256xf32>, vector<8x256xf32> -> vector<8x256xf32>
    %c0_3 = arith.constant 0 : index
    %c0_4 = arith.constant 0 : index
    %3 = vector.load %arg3[%c0_3, %c0_4] : memref<1x256xf32, #tpu.memory_space<vmem>>, vector<1x256xf32>
    %4 = vector.broadcast %3 : vector<1x256xf32> to vector<8x256xf32>
    %5 = arith.addf %2, %4 : vector<8x256xf32>
    %cst_5 = arith.constant 0.000000e+00 : f32
    %6 = vector.broadcast %cst_5 : f32 to vector<8x256xf32>
    %7 = arith.cmpf ogt, %5, %6 : vector<8x256xf32>
    %cst_6 = arith.constant 0.00999999977 : f32
    %8 = vector.broadcast %cst_6 : f32 to vector<8x256xf32>
    %9 = arith.mulf %8, %5 : vector<8x256xf32>
    %10 = arith.select %7, %5, %9 : vector<8x256xi1>, vector<8x256xf32>
    %c0_7 = arith.constant 0 : index
    %c0_8 = arith.constant 0 : index
    %11 = vector.load %arg4[%c0_7, %c0_8] : memref<256x16xf32, #tpu.memory_space<vmem>>, vector<256x16xf32>
    %cst_9 = arith.constant dense<0.000000e+00> : vector<8x16xf32>
    %12 = tpu.matmul %10, %11, %cst_9 {dimension_numbers = #tpu.dot_dimension_numbers<[1], [0], [0], [1], [0, 0, 1, 1], [], []>} : vector<8x256xf32>, vector<256x16xf32>, vector<8x16xf32> -> vector<8x16xf32>
    %c0_10 = arith.constant 0 : index
    %c0_11 = arith.constant 0 : index
    %13 = vector.load %arg5[%c0_10, %c0_11] : memref<1x16xf32, #tpu.memory_space<vmem>>, vector<1x16xf32>
    %14 = vector.broadcast %13 : vector<1x16xf32> to vector<8x16xf32>
    %15 = arith.addf %12, %14 : vector<8x16xf32>
    %16 = tpu.transpose %15, [1, 0] : vector<8x16xf32> -> vector<16x8xf32>
    %c0_12 = arith.constant 0 : index
    %c0_13 = arith.constant 0 : index
    %17 = vector.load %arg6[%c0_12, %c0_13] : memref<16x8xf32, #tpu.memory_space<vmem>>, vector<16x8xf32>
    tpu.vector_store %arg6[%c0_12, %c0_13], %16 {strides = array<i32>} : memref<16x8xf32, #tpu.memory_space<vmem>>, vector<16x8xf32>,
    return
  }
  func.func @transform_0(%arg0: i32) -> (i32, i32) {
    %c0_i32 = arith.constant 0 : i32
    %c0_i32_0 = arith.constant 0 : i32
    return %arg0, %c0_i32 : i32, i32
  }
  func.func @transform_1(%arg0: i32) -> (i32, i32) {
    %c0_i32 = arith.constant 0 : i32
    %c0_i32_0 = arith.constant 0 : i32
    %c0_i32_1 = arith.constant 0 : i32
    return %c0_i32, %c0_i32_0 : i32, i32
  }
  func.func @transform_2(%arg0: i32) -> (i32, i32) {
    %c0_i32 = arith.constant 0 : i32
    %c0_i32_0 = arith.constant 0 : i32
    %c0_i32_1 = arith.constant 0 : i32
    return %c0_i32, %c0_i32_0 : i32, i32
  }
  func.func @transform_3(%arg0: i32) -> (i32, i32) {
    %c0_i32 = arith.constant 0 : i32
    %c0_i32_0 = arith.constant 0 : i32
    %c0_i32_1 = arith.constant 0 : i32
    return %c0_i32, %c0_i32_0 : i32, i32
  }
  func.func @transform_4(%arg0: i32) -> (i32, i32) {
    %c0_i32 = arith.constant 0 : i32
    %c0_i32_0 = arith.constant 0 : i32
    %c0_i32_1 = arith.constant 0 : i32
    return %c0_i32, %c0_i32_0 : i32, i32
  }
  func.func @transform_5(%arg0: i32) -> (i32, i32) {
    %c0_i32 = arith.constant 0 : i32
    %c0_i32_0 = arith.constant 0 : i32
    return %c0_i32, %arg0 : i32, i32
  }
}

</mosaic_0001>

<llo_original>
// kernel: tpu_custom_call.1
$region0: #{tpu_custom_call.1}
  #allocation0 [shape = 'u32[]', space=smem, size = 0x4, offset = 0x4, fixed_abs, tag = 'smem constant byte address 0x4 - core index']
  #allocation1 [shape = 'u32[144,128]{1,0:T(1,128)}', space=vmem, size = 0x12000, scoped, tag = 'internal scratch']
  %s0 = inlined_call_operand.vmem [shape: f32[8,768], index: 0, kind: input, shape index: {}]
  %s1 = inlined_call_operand.hbm [shape: f32[768,256], index: 1, kind: input, shape index: {}]
  %s2 = inlined_call_operand.vmem [shape: f32[1,256], index: 2, kind: input, shape index: {}]
  %s3 = inlined_call_operand.vmem [shape: f32[256,16], index: 3, kind: input, shape index: {}]
  %s4 = inlined_call_operand.vmem [shape: f32[1,16], index: 4, kind: input, shape index: {}]
  %s5 = inlined_call_operand.vmem [shape: f32[16,8], index: 5, kind: output, shape index: {}]
  %s6 = sld [smem:[#allocation0]]
  $region34: #{tpu_custom_call.1} parent=0
    _
  %s8 = ssub.s32 1, %s6
  %s9 = scalar_select 0, %s8, %s6
  $region1: #{tpu_custom_call.1} parent=0
    #allocation2 [shape = 'u8[786432]{0}', space=vmem, size = 0xc0000, scoped, tag = 'input window, operand 1, single buffered']
    #allocation3 [shape = 's32[1]{0}', space=sflag, size = 0x4, scoped, tag = 'scoped memory for tpu_custom_call.1']
    %10 = vsyncpa [#allocation3], 0
    // Predicated region
    $region2: #{tpu_custom_call.1} parent=1 // pred_check
      _
    $region3: #{tpu_custom_call.1} parent=1 // pred_check_branch
      %12 = sbr.rel (0) target = $region5
    $region4: #{tpu_custom_call.1} parent=1 // pred_region
      _
    $region5: #{tpu_custom_call.1} parent=1 // pred_fallthru
      _
    // Predicated region
    $region6: #{tpu_custom_call.1} parent=1 // pred_check
      _
    $region7: #{tpu_custom_call.1} parent=1 // pred_check_branch
      %14 = sbr.rel (0) target = $region9
    $region8: #{tpu_custom_call.1} parent=1 // pred_region
      %s16 = ssub.s32 24576, 24576
      %17 = vsyncadd [#allocation3], %s16
      %s18 = sshll.u32 [#allocation2], 4
      %s19 = int_to_ptr.vmem [resolvable:$true] %s18
      %24 = dma.hbm_to_vmem [thread:$0]  %s1, 24576, %s19, [#allocation3], 256, 256, 16
    $region9: #{tpu_custom_call.1} parent=1 // pred_fallthru
      _
    // Predicated region
    $region10: #{tpu_custom_call.1} parent=1 // pred_check
      _
    $region11: #{tpu_custom_call.1} parent=1 // pred_check_branch
      %26 = sbr.rel (0) target = $region13
    $region12: #{tpu_custom_call.1} parent=1 // pred_region
      _
    $region13: #{tpu_custom_call.1} parent=1 // pred_fallthru
      _
    // Predicated region
    $region14: #{tpu_custom_call.1} parent=1 // pred_check
      _
    $region15: #{tpu_custom_call.1} parent=1 // pred_check_branch
      %28 = sbr.rel (0) target = $region17
    $region16: #{tpu_custom_call.1} parent=1 // pred_region
      _
    $region17: #{tpu_custom_call.1} parent=1 // pred_fallthru
      _
    // Predicated region
    $region18: #{tpu_custom_call.1} parent=1 // pred_check
      _
    $region19: #{tpu_custom_call.1} parent=1 // pred_check_branch
      %30 = sbr.rel (0) target = $region21
    $region20: #{tpu_custom_call.1} parent=1 // pred_region
      _
    $region21: #{tpu_custom_call.1} parent=1 // pred_fallthru
      _
    // Predicated region
    $region22: #{tpu_custom_call.1} parent=1 // pred_check
      _
    $region23: #{tpu_custom_call.1} parent=1 // pred_check_branch
      %32 = sbr.rel (0) target = $region25
    $region24: #{tpu_custom_call.1} parent=1 // pred_region
      %33 = dma.done [#allocation3], 24576
    $region25: #{tpu_custom_call.1} parent=1 // pred_fallthru
      _
    %v34 = vld [vmem:[%s0] sm:$0xff]
    %v35 = vld [vmem:[%s0 + $0x8] sm:$0xff]
    %v36 = vld [vmem:[%s0 + $0x10] sm:$0xff]
    %v37 = vld [vmem:[%s0 + $0x18] sm:$0xff]
    %v38 = vld [vmem:[%s0 + $0x20] sm:$0xff]
    %v39 = vld [vmem:[%s0 + $0x28] sm:$0xff]
    %v40 = vld [vmem:[#allocation2] sm:$0xff]
    %v41 = vld [vmem:[#allocation2 + $0x8] sm:$0xff]
    %v42 = vld [vmem:[#allocation2 + $0x10] sm:$0xff]
    %v43 = vld [vmem:[#allocation2 + $0x18] sm:$0xff]
    %v44 = vld [vmem:[#allocation2 + $0x20] sm:$0xff]
    %v45 = vld [vmem:[#allocation2 + $0x28] sm:$0xff]
    %v46 = vld [vmem:[#allocation2 + $0x30] sm:$0xff]
    %v47 = vld [vmem:[#allocation2 + $0x38] sm:$0xff]
    %v48 = vld [vmem:[#allocation2 + $0x40] sm:$0xff]
    %v49 = vld [vmem:[#allocation2 + $0x48] sm:$0xff]
    %v50 = vld [vmem:[#allocation2 + $0x50] sm:$0xff]
    %v51 = vld [vmem:[#allocation2 + $0x58] sm:$0xff]
    %v52 = vld [vmem:[#allocation2 + $0x60] sm:$0xff]
    %v53 = vld [vmem:[#allocation2 + $0x68] sm:$0xff]
    %v54 = vld [vmem:[#allocation2 + $0x70] sm:$0xff]
    %v55 = vld [vmem:[#allocation2 + $0x78] sm:$0xff]
    %v56 = vld [vmem:[#allocation2 + $0x80] sm:$0xff]
    %v57 = vld [vmem:[#allocation2 + $0x88] sm:$0xff]
    %v58 = vld [vmem:[#allocation2 + $0x90] sm:$0xff]
    %v59 = vld [vmem:[#allocation2 + $0x98] sm:$0xff]
    %v60 = vld [vmem:[#allocation2 + $0xa0] sm:$0xff]
    %v61 = vld [vmem:[#allocation2 + $0xa8] sm:$0xff]
    %v62 = vld [vmem:[#allocation2 + $0xb0] sm:$0xff]
    %v63 = vld [vmem:[#allocation2 + $0xb8] sm:$0xff]
    %v64 = vld [vmem:[#allocation2 + $0xc0] sm:$0xff]
    %v65 = vld [vmem:[#allocation2 + $0xc8] sm:$0xff]
    %v66 = vld [vmem:[#allocation2 + $0xd0] sm:$0xff]
    %v67 = vld [vmem:[#allocation2 + $0xd8] sm:$0xff]
    %v68 = vld [vmem:[#allocation2 + $0xe0] sm:$0xff]
    %v69 = vld [vmem:[#allocation2 + $0xe8] sm:$0xff]
    %v70 = vld [vmem:[#allocation2 + $0xf0] sm:$0xff]
    %v71 = vld [vmem:[#allocation2 + $0xf8] sm:$0xff]
    %v72 = vld [vmem:[#allocation2 + $0x100] sm:$0xff]
    %v73 = vld [vmem:[#allocation2 + $0x108] sm:$0xff]
    %v74 = vld [vmem:[#allocation2 + $0x110] sm:$0xff]
    %v75 = vld [vmem:[#allocation2 + $0x118] sm:$0xff]
    %v76 = vld [vmem:[#allocation2 + $0x120] sm:$0xff]
    %v77 = vld [vmem:[#allocation2 + $0x128] sm:$0xff]
    %v78 = vld [vmem:[#allocation2 + $0x130] sm:$0xff]
    %v79 = vld [vmem:[#allocation2 + $0x138] sm:$0xff]
    %v80 = vld [vmem:[#allocation2 + $0x140] sm:$0xff]
    %v81 = vld [vmem:[#allocation2 + $0x148] sm:$0xff]
    %v82 = vld [vmem:[#allocation2 + $0x150] sm:$0xff]
    %v83 = vld [vmem:[#allocation2 + $0x158] sm:$0xff]
    %v84 = vld [vmem:[#allocation2 + $0x160] sm:$0xff]
    %v85 = vld [vmem:[#allocation2 + $0x168] sm:$0xff]
    %v86 = vld [vmem:[#allocation2 + $0x170] sm:$0xff]
    %v87 = vld [vmem:[#allocation2 + $0x178] sm:$0xff]
    %v88 = vld [vmem:[#allocation2 + $0x180] sm:$0xff]
    %v89 = vld [vmem:[#allocation2 + $0x188] sm:$0xff]
    %v90 = vld [vmem:[#allocation2 + $0x190] sm:$0xff]
    %v91 = vld [vmem:[#allocation2 + $0x198] sm:$0xff]
    %v92 = vld [vmem:[#allocation2 + $0x1a0] sm:$0xff]
    %v93 = vld [vmem:[#allocation2 + $0x1a8] sm:$0xff]
    %v94 = vld [vmem:[#allocation2 + $0x1b0] sm:$0xff]
    %v95 = vld [vmem:[#allocation2 + $0x1b8] sm:$0xff]
    %v96 = vld [vmem:[#allocation2 + $0x1c0] sm:$0xff]
    %v97 = vld [vmem:[#allocation2 + $0x1c8] sm:$0xff]
    %v98 = vld [vmem:[#allocation2 + $0x1d0] sm:$0xff]
    %v99 = vld [vmem:[#allocation2 + $0x1d8] sm:$0xff]
    %v100 = vld [vmem:[#allocation2 + $0x1e0] sm:$0xff]
    %v101 = vld [vmem:[#allocation2 + $0x1e8] sm:$0xff]
    %v102 = vld [vmem:[#allocation2 + $0x1f0] sm:$0xff]
    %v103 = vld [vmem:[#allocation2 + $0x1f8] sm:$0xff]
    %v104 = vld [vmem:[#allocation2 + $0x200] sm:$0xff]
    %v105 = vld [vmem:[#allocation2 + $0x208] sm:$0xff]
    %v106 = vld [vmem:[#allocation2 + $0x210] sm:$0xff]
    %v107 = vld [vmem:[#allocation2 + $0x218] sm:$0xff]
    %v108 = vld [vmem:[#allocation2 + $0x220] sm:$0xff]
    %v109 = vld [vmem:[#allocation2 + $0x228] sm:$0xff]
    %v110 = vld [vmem:[#allocation2 + $0x230] sm:$0xff]
    %v111 = vld [vmem:[#allocation2 + $0x238] sm:$0xff]
    %v112 = vld [vmem:[#allocation2 + $0x240] sm:$0xff]
    %v113 = vld [vmem:[#allocation2 + $0x248] sm:$0xff]
    %v114 = vld [vmem:[#allocation2 + $0x250] sm:$0xff]
    %v115 = vld [vmem:[#allocation2 + $0x258] sm:$0xff]
    %v116 = vld [vmem:[#allocation2 + $0x260] sm:$0xff]
    %v117 = vld [vmem:[#allocation2 + $0x268] sm:$0xff]
    %v118 = vld [vmem:[#allocation2 + $0x270] sm:$0xff]
    %v119 = vld [vmem:[#allocation2 + $0x278] sm:$0xff]
    %v120 = vld [vmem:[#allocation2 + $0x280] sm:$0xff]
    %v121 = vld [vmem:[#allocation2 + $0x288] sm:$0xff]
    %v122 = vld [vmem:[#allocation2 + $0x290] sm:$0xff]
    %v123 = vld [vmem:[#allocation2 + $0x298] sm:$0xff]
    %v124 = vld [vmem:[#allocation2 + $0x2a0] sm:$0xff]
    %v125 = vld [vmem:[#allocation2 + $0x2a8] sm:$0xff]
    %v126 = vld [vmem:[#allocation2 + $0x2b0] sm:$0xff]
    %v127 = vld [vmem:[#allocation2 + $0x2b8] sm:$0xff]
    %v128 = vld [vmem:[#allocation2 + $0x2c0] sm:$0xff]
    %v129 = vld [vmem:[#allocation2 + $0x2c8] sm:$0xff]
    %v130 = vld [vmem:[#allocation2 + $0x2d0] sm:$0xff]
    %v131 = vld [vmem:[#allocation2 + $0x2d8] sm:$0xff]
    %v132 = vld [vmem:[#allocation2 + $0x2e0] sm:$0xff]
    %v133 = vld [vmem:[#allocation2 + $0x2e8] sm:$0xff]
    %v134 = vld [vmem:[#allocation2 + $0x2f0] sm:$0xff]
    %v135 = vld [vmem:[#allocation2 + $0x2f8] sm:$0xff]
    %v136 = vld [vmem:[#allocation2 + $0x300] sm:$0xff]
    %v137 = vld [vmem:[#allocation2 + $0x308] sm:$0xff]
    %v138 = vld [vmem:[#allocation2 + $0x310] sm:$0xff]
    %v139 = vld [vmem:[#allocation2 + $0x318] sm:$0xff]
    %v140 = vld [vmem:[#allocation2 + $0x320] sm:$0xff]
    %v141 = vld [vmem:[#allocation2 + $0x328] sm:$0xff]
    %v142 = vld [vmem:[#allocation2 + $0x330] sm:$0xff]
    %v143 = vld [vmem:[#allocation2 + $0x338] sm:$0xff]
    %v144 = vld [vmem:[#allocation2 + $0x340] sm:$0xff]
    %v145 = vld [vmem:[#allocation2 + $0x348] sm:$0xff]
    %v146 = vld [vmem:[#allocation2 + $0x350] sm:$0xff]
    %v147 = vld [vmem:[#allocation2 + $0x358] sm:$0xff]
    %v148 = vld [vmem:[#allocation2 + $0x360] sm:$0xff]
    %v149 = vld [vmem:[#allocation2 + $0x368] sm:$0xff]
    %v150 = vld [vmem:[#allocation2 + $0x370] sm:$0xff]
    %v151 = vld [vmem:[#allocation2 + $0x378] sm:$0xff]
    %v152 = vld [vmem:[#allocation2 + $0x380] sm:$0xff]
    %v153 = vld [vmem:[#allocation2 + $0x388] sm:$0xff]
    %v154 = vld [vmem:[#allocation2 + $0x390] sm:$0xff]
    %v155 = vld [vmem:[#allocation2 + $0x398] sm:$0xff]
    %v156 = vld [vmem:[#allocation2 + $0x3a0] sm:$0xff]
    %v157 = vld [vmem:[#allocation2 + $0x3a8] sm:$0xff]
    %v158 = vld [vmem:[#allocation2 + $0x3b0] sm:$0xff]
    %v159 = vld [vmem:[#allocation2 + $0x3b8] sm:$0xff]
    %v160 = vld [vmem:[#allocation2 + $0x3c0] sm:$0xff]
    %v161 = vld [vmem:[#allocation2 + $0x3c8] sm:$0xff]
    %v162 = vld [vmem:[#allocation2 + $0x3d0] sm:$0xff]
    %v163 = vld [vmem:[#allocation2 + $0x3d8] sm:$0xff]
    %v164 = vld [vmem:[#allocation2 + $0x3e0] sm:$0xff]
    %v165 = vld [vmem:[#allocation2 + $0x3e8] sm:$0xff]
    %v166 = vld [vmem:[#allocation2 + $0x3f0] sm:$0xff]
    %v167 = vld [vmem:[#allocation2 + $0x3f8] sm:$0xff]
    %v168 = vld [vmem:[#allocation2 + $0x400] sm:$0xff]
    %v169 = vld [vmem:[#allocation2 + $0x408] sm:$0xff]
    %v170 = vld [vmem:[#allocation2 + $0x410] sm:$0xff]
    %v171 = vld [vmem:[#allocation2 + $0x418] sm:$0xff]
    %v172 = vld [vmem:[#allocation2 + $0x420] sm:$0xff]
    %v173 = vld [vmem:[#allocation2 + $0x428] sm:$0xff]
    %v174 = vld [vmem:[#allocation2 + $0x430] sm:$0xff]
    %v175 = vld [vmem:[#allocation2 + $0x438] sm:$0xff]
    %v176 = vld [vmem:[#allocation2 + $0x440] sm:$0xff]
    %v177 = vld [vmem:[#allocation2 + $0x448] sm:$0xff]
    %v178 = vld [vmem:[#allocation2 + $0x450] sm:$0xff]
    %v179 = vld [vmem:[#allocation2 + $0x458] sm:$0xff]
    %v180 = vld [vmem:[#allocation2 + $0x460] sm:$0xff]
    %v181 = vld [vmem:[#allocation2 + $0x468] sm:$0xff]
    %v182 = vld [vmem:[#allocation2 + $0x470] sm:$0xff]
    %v183 = vld [vmem:[#allocation2 + $0x478] sm:$0xff]
    %v184 = vld [vmem:[#allocation2 + $0x480] sm:$0xff]
    %v185 = vld [vmem:[#allocation2 + $0x488] sm:$0xff]
    %v186 = vld [vmem:[#allocation2 + $0x490] sm:$0xff]
    %v187 = vld [vmem:[#allocation2 + $0x498] sm:$0xff]
    %v188 = vld [vmem:[#allocation2 + $0x4a0] sm:$0xff]
    %v189 = vld [vmem:[#allocation2 + $0x4a8] sm:$0xff]
    %v190 = vld [vmem:[#allocation2 + $0x4b0] sm:$0xff]
    %v191 = vld [vmem:[#allocation2 + $0x4b8] sm:$0xff]
    %v192 = vld [vmem:[#allocation2 + $0x4c0] sm:$0xff]
    %v193 = vld [vmem:[#allocation2 + $0x4c8] sm:$0xff]
    %v194 = vld [vmem:[#allocation2 + $0x4d0] sm:$0xff]
    %v195 = vld [vmem:[#allocation2 + $0x4d8] sm:$0xff]
    %v196 = vld [vmem:[#allocation2 + $0x4e0] sm:$0xff]
    %v197 = vld [vmem:[#allocation2 + $0x4e8] sm:$0xff]
    %v198 = vld [vmem:[#allocation2 + $0x4f0] sm:$0xff]
    %v199 = vld [vmem:[#allocation2 + $0x4f8] sm:$0xff]
    %v200 = vld [vmem:[#allocation2 + $0x500] sm:$0xff]
    %v201 = vld [vmem:[#allocation2 + $0x508] sm:$0xff]
    %v202 = vld [vmem:[#allocation2 + $0x510] sm:$0xff]
    %v203 = vld [vmem:[#allocation2 + $0x518] sm:$0xff]
    %v204 = vld [vmem:[#allocation2 + $0x520] sm:$0xff]
    %v205 = vld [vmem:[#allocation2 + $0x528] sm:$0xff]
    %v206 = vld [vmem:[#allocation2 + $0x530] sm:$0xff]
    %v207 = vld [vmem:[#allocation2 + $0x538] sm:$0xff]
    %v208 = vld [vmem:[#allocation2 + $0x540] sm:$0xff]
    %v209 = vld [vmem:[#allocation2 + $0x548] sm:$0xff]
    %v210 = vld [vmem:[#allocation2 + $0x550] sm:$0xff]
    %v211 = vld [vmem:[#allocation2 + $0x558] sm:$0xff]
    %v212 = vld [vmem:[#allocation2 + $0x560] sm:$0xff]
    %v213 = vld [vmem:[#allocation2 + $0x568] sm:$0xff]
    %v214 = vld [vmem:[#allocation2 + $0x570] sm:$0xff]
    %v215 = vld [vmem:[#allocation2 + $0x578] sm:$0xff]
    %v216 = vld [vmem:[#allocation2 + $0x580] sm:$0xff]
    %v217 = vld [vmem:[#allocation2 + $0x588] sm:$0xff]
    %v218 = vld [vmem:[#allocation2 + $0x590] sm:$0xff]
    %v219 = vld [vmem:[#allocation2 + $0x598] sm:$0xff]
    %v220 = vld [vmem:[#allocation2 + $0x5a0] sm:$0xff]
    %v221 = vld [vmem:[#allocation2 + $0x5a8] sm:$0xff]
    %v222 = vld [vmem:[#allocation2 + $0x5b0] sm:$0xff]
    %v223 = vld [vmem:[#allocation2 + $0x5b8] sm:$0xff]
    %v224 = vld [vmem:[#allocation2 + $0x5c0] sm:$0xff]
    %v225 = vld [vmem:[#allocation2 + $0x5c8] sm:$0xff]
    %v226 = vld [vmem:[#allocation2 + $0x5d0] sm:$0xff]
    %v227 = vld [vmem:[#allocation2 + $0x5d8] sm:$0xff]
    %v228 = vld [vmem:[#allocation2 + $0x5e0] sm:$0xff]
    %v229 = vld [vmem:[#allocation2 + $0x5e8] sm:$0xff]
    %v230 = vld [vmem:[#allocation2 + $0x5f0] sm:$0xff]
    %v231 = vld [vmem:[#allocation2 + $0x5f8] sm:$0xff]
    %v232 = vld [vmem:[%s2] sm:$0x3]
    %v234 = vlaneseq
    %v235 = vshrl.u32 %v234, 7
    %v236 = vsub.s32 0, %v235
    %v237 = vrot.slane %v232, %v236
    %v238 = vlaneseq
    %v239 = vshrl.u32 %v238, 7
    %v240 = vsub.s32 1, %v239
    %v241 = vrot.slane %v232, %v240
    %244 = vmatprep.subr.mxu0 %v71
    %245 = vmatpush1.msra.mxu0 %v70
    %246 = vmatprep.subr.mxu0 %v69
    %247 = vmatpush1.msra.mxu0 %v68
    %248 = vmatprep.subr.mxu0 %v67
    %249 = vmatpush1.msra.mxu0 %v66
    %250 = vmatprep.subr.mxu0 %v65
    %251 = vmatpush1.msra.mxu0 %v64
    %252 = vmatprep.subr.mxu0 %v63
    %253 = vmatpush1.msra.mxu0 %v62
    %254 = vmatprep.subr.mxu0 %v61
    %255 = vmatpush1.msra.mxu0 %v60
    %256 = vmatprep.subr.mxu0 %v59
    %257 = vmatpush1.msra.mxu0 %v58
    %258 = vmatprep.subr.mxu0 %v57
    %259 = vmatpush1.msra.mxu0 %v56
    %260 = vmatprep.subr.mxu0 %v55
    %261 = vmatpush1.msra.mxu0 %v54
    %262 = vmatprep.subr.mxu0 %v53
    %263 = vmatpush1.msra.mxu0 %v52
    %264 = vmatprep.subr.mxu0 %v51
    %265 = vmatpush1.msra.mxu0 %v50
    %266 = vmatprep.subr.mxu0 %v49
    %267 = vmatpush1.msra.mxu0 %v48
    %268 = vmatprep.subr.mxu0 %v47
    %269 = vmatpush1.msra.mxu0 %v46
    %270 = vmatprep.subr.mxu0 %v45
    %271 = vmatpush1.msra.mxu0 %v44
    %272 = vmatprep.subr.mxu0 %v43
    %273 = vmatpush1.msra.mxu0 %v42
    %274 = vmatprep.subr.mxu0 %v41
    %275 = vmatpush1.msra.mxu0 %v40
    %276 = vmatprep.subr.mxu0 %v103
    %277 = vmatpush2.msra.mxu0 %v102
    %278 = vmatprep.subr.mxu0 %v101
    %279 = vmatpush2.msra.mxu0 %v100
    %280 = vmatprep.subr.mxu0 %v99
    %281 = vmatpush2.msra.mxu0 %v98
    %282 = vmatprep.subr.mxu0 %v97
    %283 = vmatpush2.msra.mxu0 %v96
    %284 = vmatprep.subr.mxu0 %v95
    %285 = vmatpush2.msra.mxu0 %v94
    %286 = vmatprep.subr.mxu0 %v93
    %287 = vmatpush2.msra.mxu0 %v92
    %288 = vmatprep.subr.mxu0 %v91
    %289 = vmatpush2.msra.mxu0 %v90
    %290 = vmatprep.subr.mxu0 %v89
    %291 = vmatpush2.msra.mxu0 %v88
    %292 = vmatprep.subr.mxu0 %v87
    %293 = vmatpush2.msra.mxu0 %v86
    %294 = vmatprep.subr.mxu0 %v85
    %295 = vmatpush2.msra.mxu0 %v84
    %296 = vmatprep.subr.mxu0 %v83
    %297 = vmatpush2.msra.mxu0 %v82
    %298 = vmatprep.subr.mxu0 %v81
    %299 = vmatpush2.msra.mxu0 %v80
    %300 = vmatprep.subr.mxu0 %v79
    %301 = vmatpush2.msra.mxu0 %v78
    %302 = vmatprep.subr.mxu0 %v77
    %303 = vmatpush2.msra.mxu0 %v76
    %304 = vmatprep.subr.mxu0 %v75
    %305 = vmatpush2.msra.mxu0 %v74
    %306 = vmatprep.subr.mxu0 %v73
    %307 = vmatpush2.msra.mxu0 %v72
    %308 = vmatprep.mubr.f32.mxu0 %v35
    %309 = vmatmul.mubr.f32.gmra.mxu0 %v34
    %v310 = vpop.f32.mrf.mxu0
    %v311 = vadd.f32 %v237, %v310
    %v312 = vpop.f32.mrf.mxu0
    %v313 = vadd.f32 %v241, %v312
    %314 = vdwg.mxu0
    %315 = vmatprep.subr.mxu0 %v135
    %316 = vmatpush1.msra.mxu0 %v134
    %317 = vmatprep.subr.mxu0 %v133
    %318 = vmatpush1.msra.mxu0 %v132
    %319 = vmatprep.subr.mxu0 %v131
    %320 = vmatpush1.msra.mxu0 %v130
    %321 = vmatprep.subr.mxu0 %v129
    %322 = vmatpush1.msra.mxu0 %v128
    %323 = vmatprep.subr.mxu0 %v127
    %324 = vmatpush1.msra.mxu0 %v126
    %325 = vmatprep.subr.mxu0 %v125
    %326 = vmatpush1.msra.mxu0 %v124
    %327 = vmatprep.subr.mxu0 %v123
    %328 = vmatpush1.msra.mxu0 %v122
    %329 = vmatprep.subr.mxu0 %v121
    %330 = vmatpush1.msra.mxu0 %v120
    %331 = vmatprep.subr.mxu0 %v119
    %332 = vmatpush1.msra.mxu0 %v118
    %333 = vmatprep.subr.mxu0 %v117
    %334 = vmatpush1.msra.mxu0 %v116
    %335 = vmatprep.subr.mxu0 %v115
    %336 = vmatpush1.msra.mxu0 %v114
    %337 = vmatprep.subr.mxu0 %v113
    %338 = vmatpush1.msra.mxu0 %v112
    %339 = vmatprep.subr.mxu0 %v111
    %340 = vmatpush1.msra.mxu0 %v110
    %341 = vmatprep.subr.mxu0 %v109
    %342 = vmatpush1.msra.mxu0 %v108
    %343 = vmatprep.subr.mxu0 %v107
    %344 = vmatpush1.msra.mxu0 %v106
    %345 = vmatprep.subr.mxu0 %v105
    %346 = vmatpush1.msra.mxu0 %v104
    %347 = vmatprep.subr.mxu0 %v167
    %348 = vmatpush2.msra.mxu0 %v166
    %349 = vmatprep.subr.mxu0 %v165
    %350 = vmatpush2.msra.mxu0 %v164
    %351 = vmatprep.subr.mxu0 %v163
    %352 = vmatpush2.msra.mxu0 %v162
    %353 = vmatprep.subr.mxu0 %v161
    %354 = vmatpush2.msra.mxu0 %v160
    %355 = vmatprep.subr.mxu0 %v159
    %356 = vmatpush2.msra.mxu0 %v158
    %357 = vmatprep.subr.mxu0 %v157
    %358 = vmatpush2.msra.mxu0 %v156
    %359 = vmatprep.subr.mxu0 %v155
    %360 = vmatpush2.msra.mxu0 %v154
    %361 = vmatprep.subr.mxu0 %v153
    %362 = vmatpush2.msra.mxu0 %v152
    %363 = vmatprep.subr.mxu0 %v151
    %364 = vmatpush2.msra.mxu0 %v150
    %365 = vmatprep.subr.mxu0 %v149
    %366 = vmatpush2.msra.mxu0 %v148
    %367 = vmatprep.subr.mxu0 %v147
    %368 = vmatpush2.msra.mxu0 %v146
    %369 = vmatprep.subr.mxu0 %v145
    %370 = vmatpush2.msra.mxu0 %v144
    %371 = vmatprep.subr.mxu0 %v143
    %372 = vmatpush2.msra.mxu0 %v142
    %373 = vmatprep.subr.mxu0 %v141
    %374 = vmatpush2.msra.mxu0 %v140
    %375 = vmatprep.subr.mxu0 %v139
    %376 = vmatpush2.msra.mxu0 %v138
    %377 = vmatprep.subr.mxu0 %v137
    %378 = vmatpush2.msra.mxu0 %v136
    %379 = vmatprep.mubr.f32.mxu0 %v37
    %380 = vmatmul.mubr.f32.gmra.mxu0 %v36
    %v381 = vpop.f32.mrf.mxu0
    %v382 = vadd.f32 %v311, %v381
    %v383 = vpop.f32.mrf.mxu0
    %v384 = vadd.f32 %v313, %v383
    %385 = vdwg.mxu0
    %386 = vmatprep.subr.mxu0 %v199
    %387 = vmatpush1.msra.mxu0 %v198
    %388 = vmatprep.subr.mxu0 %v197
    %389 = vmatpush1.msra.mxu0 %v196
    %390 = vmatprep.subr.mxu0 %v195
    %391 = vmatpush1.msra.mxu0 %v194
    %392 = vmatprep.subr.mxu0 %v193
    %393 = vmatpush1.msra.mxu0 %v192
    %394 = vmatprep.subr.mxu0 %v191
    %395 = vmatpush1.msra.mxu0 %v190
    %396 = vmatprep.subr.mxu0 %v189
    %397 = vmatpush1.msra.mxu0 %v188
    %398 = vmatprep.subr.mxu0 %v187
    %399 = vmatpush1.msra.mxu0 %v186
    %400 = vmatprep.subr.mxu0 %v185
    %401 = vmatpush1.msra.mxu0 %v184
    %402 = vmatprep.subr.mxu0 %v183
    %403 = vmatpush1.msra.mxu0 %v182
    %404 = vmatprep.subr.mxu0 %v181
    %405 = vmatpush1.msra.mxu0 %v180
    %406 = vmatprep.subr.mxu0 %v179
    %407 = vmatpush1.msra.mxu0 %v178
    %408 = vmatprep.subr.mxu0 %v177
    %409 = vmatpush1.msra.mxu0 %v176
    %410 = vmatprep.subr.mxu0 %v175
    %411 = vmatpush1.msra.mxu0 %v174
    %412 = vmatprep.subr.mxu0 %v173
    %413 = vmatpush1.msra.mxu0 %v172
    %414 = vmatprep.subr.mxu0 %v171
    %415 = vmatpush1.msra.mxu0 %v170
    %416 = vmatprep.subr.mxu0 %v169
    %417 = vmatpush1.msra.mxu0 %v168
    %418 = vmatprep.subr.mxu0 %v231
    %419 = vmatpush2.msra.mxu0 %v230
    %420 = vmatprep.subr.mxu0 %v229
    %421 = vmatpush2.msra.mxu0 %v228
    %422 = vmatprep.subr.mxu0 %v227
    %423 = vmatpush2.msra.mxu0 %v226
    %424 = vmatprep.subr.mxu0 %v225
    %425 = vmatpush2.msra.mxu0 %v224
    %426 = vmatprep.subr.mxu0 %v223
    %427 = vmatpush2.msra.mxu0 %v222
    %428 = vmatprep.subr.mxu0 %v221
    %429 = vmatpush2.msra.mxu0 %v220
    %430 = vmatprep.subr.mxu0 %v219
    %431 = vmatpush2.msra.mxu0 %v218
    %432 = vmatprep.subr.mxu0 %v217
    %433 = vmatpush2.msra.mxu0 %v216
    %434 = vmatprep.subr.mxu0 %v215
    %435 = vmatpush2.msra.mxu0 %v214
    %436 = vmatprep.subr.mxu0 %v213
    %437 = vmatpush2.msra.mxu0 %v212
    %438 = vmatprep.subr.mxu0 %v211
    %439 = vmatpush2.msra.mxu0 %v210
    %440 = vmatprep.subr.mxu0 %v209
    %441 = vmatpush2.msra.mxu0 %v208
    %442 = vmatprep.subr.mxu0 %v207
    %443 = vmatpush2.msra.mxu0 %v206
    %444 = vmatprep.subr.mxu0 %v205
    %445 = vmatpush2.msra.mxu0 %v204
    %446 = vmatprep.subr.mxu0 %v203
    %447 = vmatpush2.msra.mxu0 %v202
    %448 = vmatprep.subr.mxu0 %v201
    %449 = vmatpush2.msra.mxu0 %v200
    %450 = vmatprep.mubr.f32.mxu0 %v39
    %451 = vmatmul.mubr.f32.gmra.mxu0 %v38
    %v452 = vpop.f32.mrf.mxu0
    %v453 = vadd.f32 %v382, %v452
    %v454 = vpop.f32.mrf.mxu0
    %v455 = vadd.f32 %v384, %v454
    %456 = vdwg.mxu0
    %vm457 = vcmp.gt.f32.partialorder %v453, 0.0
    %vm458 = vcmp.gt.f32.partialorder %v455, 0.0
    %v459 = vmul.f32 %v453, 0.01
    %v460 = vmul.f32 %v455, 0.01
    %v461 = vsel %vm457, %v453, %v459
    %v462 = vsel %vm458, %v455, %v460
    %v463 = vld [vmem:[%s3] sm:$0xff]
    %v464 = vld [vmem:[%s3 + $0x8] sm:$0xff]
    %v465 = vld [vmem:[%s3 + $0x10] sm:$0xff]
    %v466 = vld [vmem:[%s3 + $0x18] sm:$0xff]
    %v467 = vld [vmem:[%s3 + $0x20] sm:$0xff]
    %v468 = vld [vmem:[%s3 + $0x28] sm:$0xff]
    %v469 = vld [vmem:[%s3 + $0x30] sm:$0xff]
    %v470 = vld [vmem:[%s3 + $0x38] sm:$0xff]
    %v471 = vld [vmem:[%s3 + $0x40] sm:$0xff]
    %v472 = vld [vmem:[%s3 + $0x48] sm:$0xff]
    %v473 = vld [vmem:[%s3 + $0x50] sm:$0xff]
    %v474 = vld [vmem:[%s3 + $0x58] sm:$0xff]
    %v475 = vld [vmem:[%s3 + $0x60] sm:$0xff]
    %v476 = vld [vmem:[%s3 + $0x68] sm:$0xff]
    %v477 = vld [vmem:[%s3 + $0x70] sm:$0xff]
    %v478 = vld [vmem:[%s3 + $0x78] sm:$0xff]
    %v479 = vld [vmem:[%s3 + $0x80] sm:$0xff]
    %v480 = vld [vmem:[%s3 + $0x88] sm:$0xff]
    %v481 = vld [vmem:[%s3 + $0x90] sm:$0xff]
    %v482 = vld [vmem:[%s3 + $0x98] sm:$0xff]
    %v483 = vld [vmem:[%s3 + $0xa0] sm:$0xff]
    %v484 = vld [vmem:[%s3 + $0xa8] sm:$0xff]
    %v485 = vld [vmem:[%s3 + $0xb0] sm:$0xff]
    %v486 = vld [vmem:[%s3 + $0xb8] sm:$0xff]
    %v487 = vld [vmem:[%s3 + $0xc0] sm:$0xff]
    %v488 = vld [vmem:[%s3 + $0xc8] sm:$0xff]
    %v489 = vld [vmem:[%s3 + $0xd0] sm:$0xff]
    %v490 = vld [vmem:[%s3 + $0xd8] sm:$0xff]
    %v491 = vld [vmem:[%s3 + $0xe0] sm:$0xff]
    %v492 = vld [vmem:[%s3 + $0xe8] sm:$0xff]
    %v493 = vld [vmem:[%s3 + $0xf0] sm:$0xff]
    %v494 = vld [vmem:[%s3 + $0xf8] sm:$0xff]
    %v495 = vld [vmem:[%s4] sm:$0x1]
    %v497 = vlaneseq
    %v498 = vshrl.u32 %v497, 7
    %v499 = vsub.s32 0, %v498
    %v500 = vrot.slane %v495, %v499
    %502 = vmatprep.subr.mxu0 0.0
    %503 = vmatpush1.msra.mxu0 %v478
    %504 = vmatprep.subr.mxu0 0.0
    %505 = vmatpush1.msra.mxu0 %v477
    %506 = vmatprep.subr.mxu0 0.0
    %507 = vmatpush1.msra.mxu0 %v476
    %508 = vmatprep.subr.mxu0 0.0
    %509 = vmatpush1.msra.mxu0 %v475
    %510 = vmatprep.subr.mxu0 0.0
    %511 = vmatpush1.msra.mxu0 %v474
    %512 = vmatprep.subr.mxu0 0.0
    %513 = vmatpush1.msra.mxu0 %v473
    %514 = vmatprep.subr.mxu0 0.0
    %515 = vmatpush1.msra.mxu0 %v472
    %516 = vmatprep.subr.mxu0 0.0
    %517 = vmatpush1.msra.mxu0 %v471
    %518 = vmatprep.subr.mxu0 0.0
    %519 = vmatpush1.msra.mxu0 %v470
    %520 = vmatprep.subr.mxu0 0.0
    %521 = vmatpush1.msra.mxu0 %v469
    %522 = vmatprep.subr.mxu0 0.0
    %523 = vmatpush1.msra.mxu0 %v468
    %524 = vmatprep.subr.mxu0 0.0
    %525 = vmatpush1.msra.mxu0 %v467
    %526 = vmatprep.subr.mxu0 0.0
    %527 = vmatpush1.msra.mxu0 %v466
    %528 = vmatprep.subr.mxu0 0.0
    %529 = vmatpush1.msra.mxu0 %v465
    %530 = vmatprep.subr.mxu0 0.0
    %531 = vmatpush1.msra.mxu0 %v464
    %532 = vmatprep.subr.mxu0 0.0
    %533 = vmatpush1.msra.mxu0 %v463
    %534 = vmatprep.subr.mxu0 0.0
    %535 = vmatpush2.msra.mxu0 %v494
    %536 = vmatprep.subr.mxu0 0.0
    %537 = vmatpush2.msra.mxu0 %v493
    %538 = vmatprep.subr.mxu0 0.0
    %539 = vmatpush2.msra.mxu0 %v492
    %540 = vmatprep.subr.mxu0 0.0
    %541 = vmatpush2.msra.mxu0 %v491
    %542 = vmatprep.subr.mxu0 0.0
    %543 = vmatpush2.msra.mxu0 %v490
    %544 = vmatprep.subr.mxu0 0.0
    %545 = vmatpush2.msra.mxu0 %v489
    %546 = vmatprep.subr.mxu0 0.0
    %547 = vmatpush2.msra.mxu0 %v488
    %548 = vmatprep.subr.mxu0 0.0
    %549 = vmatpush2.msra.mxu0 %v487
    %550 = vmatprep.subr.mxu0 0.0
    %551 = vmatpush2.msra.mxu0 %v486
    %552 = vmatprep.subr.mxu0 0.0
    %553 = vmatpush2.msra.mxu0 %v485
    %554 = vmatprep.subr.mxu0 0.0
    %555 = vmatpush2.msra.mxu0 %v484
    %556 = vmatprep.subr.mxu0 0.0
    %557 = vmatpush2.msra.mxu0 %v483
    %558 = vmatprep.subr.mxu0 0.0
    %559 = vmatpush2.msra.mxu0 %v482
    %560 = vmatprep.subr.mxu0 0.0
    %561 = vmatpush2.msra.mxu0 %v481
    %562 = vmatprep.subr.mxu0 0.0
    %563 = vmatpush2.msra.mxu0 %v480
    %564 = vmatprep.subr.mxu0 0.0
    %565 = vmatpush2.msra.mxu0 %v479
    %566 = vmatprep.mubr.f32.mxu0 %v462
    %567 = vmatmul.mubr.f32.gmra.mxu0 %v461
    %v568 = vpop.f32.mrf.mxu0
    %v569 = vadd.f32 %v500, %v568
    %v570 = vpop.f32.mrf.mxu0
    %571 = vdwg.mxu0
    %572 = vxpose.xlu0.b32.start [1/16] %v569, 128
    %573 = vxpose.xlu0.b32.cont [2/16] 0.0, 128
    %574 = vxpose.xlu0.b32.cont [3/16] 0.0, 128
    %575 = vxpose.xlu0.b32.cont [4/16] 0.0, 128
    %576 = vxpose.xlu0.b32.cont [5/16] 0.0, 128
    %577 = vxpose.xlu0.b32.cont [6/16] 0.0, 128
    %578 = vxpose.xlu0.b32.cont [7/16] 0.0, 128
    %579 = vxpose.xlu0.b32.cont [8/16] 0.0, 128
    %580 = vxpose.xlu0.b32.cont [9/16] 0.0, 128
    %581 = vxpose.xlu0.b32.cont [10/16] 0.0, 128
    %582 = vxpose.xlu0.b32.cont [11/16] 0.0, 128
    %583 = vxpose.xlu0.b32.cont [12/16] 0.0, 128
    %584 = vxpose.xlu0.b32.cont [13/16] 0.0, 128
    %585 = vxpose.xlu0.b32.cont [14/16] 0.0, 128
    %586 = vxpose.xlu0.b32.cont [15/16] 0.0, 128
    %587 = vxpose.xlu0.b32.end [16/16] 0.0, 128
    %v588 = vpop.trf.xlu0
    %v589 = vpop.trf.xlu0
    %v590 = vpop.trf.xlu0
    %v591 = vpop.trf.xlu0
    %v592 = vpop.trf.xlu0
    %v593 = vpop.trf.xlu0
    %v594 = vpop.trf.xlu0
    %v595 = vpop.trf.xlu0
    %v596 = vpop.trf.xlu0
    %v597 = vpop.trf.xlu0
    %v598 = vpop.trf.xlu0
    %v599 = vpop.trf.xlu0
    %v600 = vpop.trf.xlu0
    %v601 = vpop.trf.xlu0
    %v602 = vpop.trf.xlu0
    %v603 = vpop.trf.xlu0
    %vm604 = vcmask 64512
    %605 = vst.msk [vmem:[%s5] sm:$0xff] %vm604, %v588
    %606 = vst.msk [vmem:[%s5 + $0x8] sm:$0xff] %vm604, %v589
    // Predicated region
    $region26: #{tpu_custom_call.1} parent=1 // pred_check
      _
    $region27: #{tpu_custom_call.1} parent=1 // pred_check_branch
      %608 = sbr.rel (0) target = $region29
    $region28: #{tpu_custom_call.1} parent=1 // pred_region
      _
    $region29: #{tpu_custom_call.1} parent=1 // pred_fallthru
      _
    // Predicated region
    $region30: #{tpu_custom_call.1} parent=1 // pred_check
      _
    $region31: #{tpu_custom_call.1} parent=1 // pred_check_branch
      %610 = sbr.rel (0) target = $region33
    $region32: #{tpu_custom_call.1} parent=1 // pred_region
      _
    $region33: #{tpu_custom_call.1} parent=1 // pred_fallthru
      _
    %611 = vsyncpa [#allocation3], 1

</llo_original>
